<compile_context>
chip_gen: v6e
topology: v6e:2x2x1
jax: 0.10.0
libtpu: 0.0.40
codegen_flags: <defaults>
</compile_context>

<pallas_src>
import functools
import math

import jax
import jax.numpy as jnp
from jax.experimental import pallas as pl
from jax.experimental.pallas import tpu as pltpu


def _round_up(a, m):
    return (a + m - 1) // m * m


def _vmem_capacity_bytes():
    """Physical VMEM of this TPU generation (fallback: v7x-sized 64 MiB)."""
    try:
        return int(pltpu.get_tpu_info().vmem_capacity_bytes)
    except Exception:
        return 64 * 2 ** 20


def _choose_tm(M, compute_dtype, vmem_cap):
    """Row-tile size for the fused path."""
    align = 16 if jnp.dtype(compute_dtype).itemsize < 4 else 8
    cap = 512 if vmem_cap >= 96 * 2 ** 20 else 256  # bigger tiles on 128 MiB parts
    if M <= align:
        return _round_up(max(M, 1), align)
    # Aim for >= 2 row tiles so megacore parts (v7x: 2 TC/chip) can split the
    # "parallel" M axis; one extra grid step is noise on single-TC v5e/v6e.
    half = _round_up(-(-M // 2), align)
    return max(align, min(cap, half))


def _fused_vmem_estimate(tm, k_in, params, single_buffer):
    param_bytes = sum(w.size * w.dtype.itemsize + b.size * b.dtype.itemsize
                      for w, b in params)
    pbuf = 1 if single_buffer else 2
    n_out = params[-1][0].shape[1]
    max_feat = max([k_in] + [w.shape[1] for w, _ in params])
    io_bytes = 2 * tm * (k_in + n_out) * 4   # double-buffered x / out row tiles
    tmp_bytes = 3 * tm * max_feat * 4        # in-kernel f32 temporaries
    return pbuf * param_bytes + io_bytes + tmp_bytes


def _resident_spec(shape, single_buffer):
    """Constant-index (whole-array resident) weight/bias block.

    The index_map never changes, so double-buffering only burns VMEM; request
    a single buffer when the API supports it.
    """
    idx = lambda i: (0,) * len(shape)
    if single_buffer and hasattr(pl, "Buffered"):
        try:
            return pl.BlockSpec(shape, idx, pipeline_mode=pl.Buffered(1))
        except TypeError:
            pass
    return pl.BlockSpec(shape, idx)


# ---------------------------------------------------------------------------
# Fused whole-MLP kernel: one grid step pushes a (tm, K) row tile through every
# layer; intermediate activations never leave VMEM, only the last layer's
# output is written back to HBM.
# ---------------------------------------------------------------------------
def _fused_mlp_kernel(x_ref, *refs, num_layers, compute_dtype):
    o_ref = refs[-1]
    h = x_ref[...].astype(compute_dtype)        # feed the MXU directly, no f32 pass
    for i in range(num_layers):
        w_ref = refs[2 * i]
        b_ref = refs[2 * i + 1]
        y = jnp.dot(h, w_ref[...], preferred_element_type=jnp.float32)
        y = y + b_ref[...]                      # (1, N) f32 bias broadcast
        if i < num_layers - 1:
            y = jnp.maximum(y, 0.0)
            h = y.astype(compute_dtype)         # carry inter-layer act in bf16
        else:
            h = y
    o_ref[...] = h.astype(o_ref.dtype)


def fused_mlp_pallas(x2, params, *, compute_dtype, tm, vmem_budget):
    """Whole MLP in one pallas_call. x2: (M, K); params: [(w_t [K,N], b [1,N])]."""
    M, K = x2.shape
    n_out = params[-1][0].shape[1]
    num_layers = len(params)

    Mp = _round_up(M, tm)
    xp = jnp.pad(x2, ((0, Mp - M), (0, 0))) if Mp != M else x2

    args = [xp]
    for w_t, b in params:
        args.append(w_t)
        args.append(b)

    kernel = functools.partial(_fused_mlp_kernel, num_layers=num_layers,
                               compute_dtype=compute_dtype)

    def run(single_buffer):
        in_specs = [pl.BlockSpec((tm, K), lambda i: (i, 0))]
        for w_t, b in params:
            in_specs.append(_resident_spec(w_t.shape, single_buffer))
            in_specs.append(_resident_spec(b.shape, single_buffer))
        est = _fused_vmem_estimate(tm, K, params, single_buffer)
        vmem_limit = int(min(max(2 * est, 32 * 2 ** 20), vmem_budget))
        return pl.pallas_call(
            kernel,
            out_shape=jax.ShapeDtypeStruct((Mp, n_out), x2.dtype),
            grid=(Mp // tm,),
            in_specs=in_specs,
            out_specs=pl.BlockSpec((tm, n_out), lambda i: (i, 0)),
            compiler_params=pltpu.CompilerParams(
                dimension_semantics=("parallel",),
                vmem_limit_bytes=vmem_limit,
            ),
        )(*args)

    try:
        # Block inside the try so any deferred lowering/compile error surfaces
        # here and we can retry with default (double) buffering.
        out = jax.block_until_ready(run(single_buffer=True))
    except Exception:
        out = run(single_buffer=False)
    return out[:M] if Mp != M else out


# ---------------------------------------------------------------------------
# Per-layer fallback: (M, N, K)-tiled matmul with an f32 VMEM accumulator.
# Used when the parameter set is too large to hold resident in VMEM.
# ---------------------------------------------------------------------------
def _linear_tiled_kernel(x_ref, w_ref, b_ref, o_ref, acc_ref, *, apply_relu):
    @pl.when(pl.program_id(2) == 0)
    def _():
        acc_ref[...] = jnp.zeros_like(acc_ref)

    # Cast the activation to the weight dtype in-kernel (no wrapper-level pass).
    acc_ref[...] += jnp.dot(x_ref[...].astype(w_ref.dtype), w_ref[...],
                            preferred_element_type=jnp.float32)

    @pl.when(pl.program_id(2) == pl.num_programs(2) - 1)
    def _():
        y = acc_ref[...] + b_ref[...]
        if apply_relu:
            y = jnp.maximum(y, 0.0)
        o_ref[...] = y.astype(o_ref.dtype)


def _pick_tile(dim, cap):
    """Largest 128-multiple tile <= cap that divides dim (dim is pre-padded)."""
    if dim <= cap:
        return dim
    t = (cap // 128) * 128
    while t >= 128:
        if dim % t == 0:
            return t
        t -= 128
    return dim  # no 128-multiple divisor; use the full extent (still legal)


def linear_pallas_tiled(x, w_t, b, apply_relu, *, out_dtype, vmem_cap=None):
    """relu?(x @ w_t + b) with K/N tiling and f32 accumulation.

    w_t / b are expected pre-padded to 128-multiple feature dims (done once at
    init), so no per-call weight padding / HBM round trip is needed.
    """
    M, K = x.shape
    Kw, N = w_t.shape
    assert K == Kw and b.shape == (1, N)
    if vmem_cap is None:
        vmem_cap = _vmem_capacity_bytes()
    big = vmem_cap >= 96 * 2 ** 20
    cap_m = 512 if big else 256
    cap_kn = 512 if big else 256
    vmem_limit = (64 if big else 32) * 2 ** 20

    tm = min(cap_m, _round_up(M, 16))
    tk = _pick_tile(K, cap_kn)
    tn = _pick_tile(N, cap_kn)
    Mp = _round_up(M, tm)
    xp = x if Mp == M else jnp.pad(x, ((0, Mp - M), (0, 0)))

    kernel = functools.partial(_linear_tiled_kernel, apply_relu=apply_relu)
    out = pl.pallas_call(
        kernel,
        out_shape=jax.ShapeDtypeStruct((Mp, N), out_dtype),
        grid=(Mp // tm, N // tn, K // tk),
        in_specs=[
            pl.BlockSpec((tm, tk), lambda i, j, k: (i, k)),
            pl.BlockSpec((tk, tn), lambda i, j, k: (k, j)),
            pl.BlockSpec((1, tn), lambda i, j, k: (0, j)),
        ],
        out_specs=pl.BlockSpec((tm, tn), lambda i, j, k: (i, j)),
        scratch_shapes=[pltpu.VMEM((tm, tn), jnp.float32)],
        compiler_params=pltpu.CompilerParams(
            dimension_semantics=("parallel", "parallel", "arbitrary"),
            vmem_limit_bytes=vmem_limit,
        ),
    )(xp, w_t, b)
    return out[:M] if Mp != M else out


class MLPPallas:
    """Mirror of the PyTorch MLP: num_layers Linear layers, ReLU between them."""

    def __init__(self, input_dim, hidden_dim, output_dim, num_layers, key,
                 param_dtype=jnp.bfloat16):
        # param_dtype=bf16 is MXU-native on v5e/v6e/v7x; pass jnp.float32 only
        # when exact fp32 torch.nn.Linear numerics are required (slower MXU).
        self.num_layers = num_layers
        self.param_dtype = param_dtype
        self.input_dim = input_dim
        self.output_dim = output_dim

        h = [hidden_dim] * (num_layers - 1)
        dims_in = [input_dim] + h
        dims_out = h + [output_dim]

        # Pre-pad every feature dim to a multiple of 128 ONCE at init so
        # kernels never re-pad weights per call and all stores are lane-dense.
        self.k_pad = _round_up(input_dim, 128)
        self.params = []
        prev_np = self.k_pad
        for n_in, n_out in zip(dims_in, dims_out):
            key, kw, kb = jax.random.split(key, 3)
            # PyTorch nn.Linear default init: U(-1/sqrt(fan_in), 1/sqrt(fan_in))
            bound = 1.0 / math.sqrt(n_in)
            w = jax.random.uniform(kw, (n_out, n_in), jnp.float32, -bound, bound)
            b = jax.random.uniform(kb, (n_out,), jnp.float32, -bound, bound)
            n_out_p = _round_up(n_out, 128)
            w_t = jnp.zeros((prev_np, n_out_p), jnp.float32)
            w_t = w_t.at[:n_in, :n_out].set(w.T)
            b_p = jnp.zeros((1, n_out_p), jnp.float32).at[0, :n_out].set(b)
            # store W.T (kernel computes x @ W.T) in param_dtype, bias in f32.
            self.params.append((w_t.astype(param_dtype), b_p))
            prev_np = n_out_p
        self.out_pad = prev_np

    def __call__(self, x, force_fallback=False):
        lead_shape = x.shape[:-1]
        x2 = x.reshape((-1, x.shape[-1]))
        M, K = x2.shape
        assert K == self.input_dim
        if self.k_pad != K:
            x2 = jnp.pad(x2, ((0, 0), (0, self.k_pad - K)))

        vmem_cap = _vmem_capacity_bytes()
        budget = max(vmem_cap - 20 * 2 ** 20, 24 * 2 ** 20)  # headroom for Mosaic
        tm = _choose_tm(M, self.param_dtype, vmem_cap)
        est = _fused_vmem_estimate(tm, self.k_pad, self.params, single_buffer=True)

        if not force_fallback and est <= budget:
            out = fused_mlp_pallas(x2, self.params,
                                   compute_dtype=self.param_dtype,
                                   tm=tm, vmem_budget=budget)
        else:
            # TODO(synk): weight-streaming middle tier (activation resident,
            # weights pipelined) before this per-layer HBM round-trip fallback.
            out = x2
            n_layers = len(self.params)
            for i, (w_t, b) in enumerate(self.params):
                last = i == n_layers - 1
                out = linear_pallas_tiled(
                    out, w_t, b, apply_relu=not last,
                    out_dtype=(x.dtype if last else self.param_dtype),
                    vmem_cap=vmem_cap)
            out = out.astype(x.dtype)

        out = out[:, :self.output_dim]
        return out.reshape(lead_shape + (self.output_dim,))


if __name__ == "__main__":
    key = jax.random.PRNGKey(0)
    key, kx, kx2, kp = jax.random.split(key, 4)

    batch, seq = 2, 8
    input_dim, hidden_dim, output_dim, num_layers = 32, 32, 16, 3

    mlp = MLPPallas(input_dim, hidden_dim, output_dim, num_layers, kp)

    def ref_forward(x):
        # Pure-JAX reference with identical precision handling (bf16 MXU inputs,
        # f32 accumulation / bias / ReLU) on the same pre-padded parameters.
        r = x.reshape(-1, input_dim)
        r = jnp.pad(r, ((0, 0), (0, mlp.k_pad - input_dim)))
        for i, (w_t, b) in enumerate(mlp.params):
            y = jnp.dot(r.astype(w_t.dtype), w_t,
                        preferred_element_type=jnp.float32) + b
            r = jnp.maximum(y, 0.0) if i < num_layers - 1 else y
        r = r[:, :output_dim]
        return r.reshape(x.shape[:-1] + (output_dim,)).astype(x.dtype)

    # 1) fused resident-weight path, small M (single row tile)
    x = jax.random.normal(kx, (batch, seq, input_dim), jnp.float32)
    out = jax.block_until_ready(mlp(x))
    assert out.shape == (batch, seq, output_dim)
    ref = ref_forward(x)
    assert jnp.allclose(out, ref, atol=2e-3, rtol=2e-3), \
        float(jnp.max(jnp.abs(out - ref)))

    # 2) fused path with ragged row count (row padding + multi-tile grid)
    xb = jax.random.normal(kx2, (5, seq, input_dim), jnp.float32)
    out_b = jax.block_until_ready(mlp(xb))
    ref_b = ref_forward(xb)
    assert out_b.shape == (5, seq, output_dim)
    assert jnp.allclose(out_b, ref_b, atol=2e-3, rtol=2e-3), \
        float(jnp.max(jnp.abs(out_b - ref_b)))

    # 3) per-layer tiled fallback path (forced), same numerics contract
    out_fb = jax.block_until_ready(mlp(x, force_fallback=True))
    assert out_fb.shape == out.shape
    assert jnp.allclose(out_fb, ref, atol=5e-3, rtol=5e-3), \
        float(jnp.max(jnp.abs(out_fb - ref)))

    print("KERNEL_OK")
</pallas_src>

<mosaic_0001>
module attributes {stable_mosaic.version = 11 : i64} {
  func.func @_fused_mlp_kernel(%arg0: i32, %arg1: memref<16x128xf32, #tpu.memory_space<vmem>>, %arg2: memref<128x128xbf16, #tpu.memory_space<vmem>>, %arg3: memref<1x128xf32, #tpu.memory_space<vmem>>, %arg4: memref<128x128xbf16, #tpu.memory_space<vmem>>, %arg5: memref<1x128xf32, #tpu.memory_space<vmem>>, %arg6: memref<128x128xbf16, #tpu.memory_space<vmem>>, %arg7: memref<1x128xf32, #tpu.memory_space<vmem>>, %arg8: memref<16x128xf32, #tpu.memory_space<vmem>>) attributes {dimension_semantics = [#tpu.dimension_semantics<parallel>], iteration_bounds = array<i64: 1>, scalar_prefetch = 0 : i64, scratch_operands = 0 : i64, tpu.core_type = #tpu.core_type<tc>, window_params = [{transform_indices = @transform_0, window_bounds = array<i64: 16, 128>}, {pipeline_mode = #tpu.pipeline_mode<synchronous>, transform_indices = @transform_1, window_bounds = array<i64: 128, 128>}, {pipeline_mode = #tpu.pipeline_mode<synchronous>, transform_indices = @transform_2, window_bounds = array<i64: 1, 128>}, {pipeline_mode = #tpu.pipeline_mode<synchronous>, transform_indices = @transform_3, window_bounds = array<i64: 128, 128>}, {pipeline_mode = #tpu.pipeline_mode<synchronous>, transform_indices = @transform_4, window_bounds = array<i64: 1, 128>}, {pipeline_mode = #tpu.pipeline_mode<synchronous>, transform_indices = @transform_5, window_bounds = array<i64: 128, 128>}, {pipeline_mode = #tpu.pipeline_mode<synchronous>, transform_indices = @transform_6, window_bounds = array<i64: 1, 128>}, {transform_indices = @transform_7, window_bounds = array<i64: 16, 128>}]} {
    %c0 = arith.constant 0 : index
    %c0_0 = arith.constant 0 : index
    %0 = vector.load %arg1[%c0, %c0_0] : memref<16x128xf32, #tpu.memory_space<vmem>>, vector<16x128xf32>
    %1 = arith.truncf %0 : vector<16x128xf32> to vector<16x128xbf16>
    %c0_1 = arith.constant 0 : index
    %c0_2 = arith.constant 0 : index
    %2 = vector.load %arg2[%c0_1, %c0_2] : memref<128x128xbf16, #tpu.memory_space<vmem>>, vector<128x128xbf16>
    %cst = arith.constant dense<0.000000e+00> : vector<16x128xf32>
    %3 = tpu.matmul %1, %2, %cst {dimension_numbers = #tpu.dot_dimension_numbers<[1], [0], [0], [1], [0, 0, 1, 1], [], []>} : vector<16x128xbf16>, vector<128x128xbf16>, vector<16x128xf32> -> vector<16x128xf32>
    %c0_3 = arith.constant 0 : index
    %c0_4 = arith.constant 0 : index
    %4 = vector.load %arg3[%c0_3, %c0_4] : memref<1x128xf32, #tpu.memory_space<vmem>>, vector<1x128xf32>
    %5 = vector.broadcast %4 : vector<1x128xf32> to vector<16x128xf32>
    %6 = arith.addf %3, %5 : vector<16x128xf32>
    %cst_5 = arith.constant 0.000000e+00 : f32
    %7 = vector.broadcast %cst_5 : f32 to vector<16x128xf32>
    %8 = arith.maximumf %6, %7 : vector<16x128xf32>
    %9 = arith.truncf %8 : vector<16x128xf32> to vector<16x128xbf16>
    %c0_6 = arith.constant 0 : index
    %c0_7 = arith.constant 0 : index
    %10 = vector.load %arg4[%c0_6, %c0_7] : memref<128x128xbf16, #tpu.memory_space<vmem>>, vector<128x128xbf16>
    %cst_8 = arith.constant dense<0.000000e+00> : vector<16x128xf32>
    %11 = tpu.matmul %9, %10, %cst_8 {dimension_numbers = #tpu.dot_dimension_numbers<[1], [0], [0], [1], [0, 0, 1, 1], [], []>} : vector<16x128xbf16>, vector<128x128xbf16>, vector<16x128xf32> -> vector<16x128xf32>
    %c0_9 = arith.constant 0 : index
    %c0_10 = arith.constant 0 : index
    %12 = vector.load %arg5[%c0_9, %c0_10] : memref<1x128xf32, #tpu.memory_space<vmem>>, vector<1x128xf32>
    %13 = vector.broadcast %12 : vector<1x128xf32> to vector<16x128xf32>
    %14 = arith.addf %11, %13 : vector<16x128xf32>
    %cst_11 = arith.constant 0.000000e+00 : f32
    %15 = vector.broadcast %cst_11 : f32 to vector<16x128xf32>
    %16 = arith.maximumf %14, %15 : vector<16x128xf32>
    %17 = arith.truncf %16 : vector<16x128xf32> to vector<16x128xbf16>
    %c0_12 = arith.constant 0 : index
    %c0_13 = arith.constant 0 : index
    %18 = vector.load %arg6[%c0_12, %c0_13] : memref<128x128xbf16, #tpu.memory_space<vmem>>, vector<128x128xbf16>
    %cst_14 = arith.constant dense<0.000000e+00> : vector<16x128xf32>
    %19 = tpu.matmul %17, %18, %cst_14 {dimension_numbers = #tpu.dot_dimension_numbers<[1], [0], [0], [1], [0, 0, 1, 1], [], []>} : vector<16x128xbf16>, vector<128x128xbf16>, vector<16x128xf32> -> vector<16x128xf32>
    %c0_15 = arith.constant 0 : index
    %c0_16 = arith.constant 0 : index
    %20 = vector.load %arg7[%c0_15, %c0_16] : memref<1x128xf32, #tpu.memory_space<vmem>>, vector<1x128xf32>
    %21 = vector.broadcast %20 : vector<1x128xf32> to vector<16x128xf32>
    %22 = arith.addf %19, %21 : vector<16x128xf32>
    %c0_17 = arith.constant 0 : index
    %c0_18 = arith.constant 0 : index
    %23 = vector.load %arg8[%c0_17, %c0_18] : memref<16x128xf32, #tpu.memory_space<vmem>>, vector<16x128xf32>
    tpu.vector_store %arg8[%c0_17, %c0_18], %22 {strides = array<i32>} : memref<16x128xf32, #tpu.memory_space<vmem>>, vector<16x128xf32>,
    return
  }
  func.func @transform_0(%arg0: i32) -> (i32, i32) {
    %c0_i32 = arith.constant 0 : i32
    %c0_i32_0 = arith.constant 0 : i32
    return %arg0, %c0_i32 : i32, i32
  }
  func.func @transform_1(%arg0: i32) -> (i32, i32) {
    %c0_i32 = arith.constant 0 : i32
    %c0_i32_0 = arith.constant 0 : i32
    %c0_i32_1 = arith.constant 0 : i32
    return %c0_i32, %c0_i32_0 : i32, i32
  }
  func.func @transform_2(%arg0: i32) -> (i32, i32) {
    %c0_i32 = arith.constant 0 : i32
    %c0_i32_0 = arith.constant 0 : i32
    %c0_i32_1 = arith.constant 0 : i32
    return %c0_i32, %c0_i32_0 : i32, i32
  }
  func.func @transform_3(%arg0: i32) -> (i32, i32) {
    %c0_i32 = arith.constant 0 : i32
    %c0_i32_0 = arith.constant 0 : i32
    %c0_i32_1 = arith.constant 0 : i32
    return %c0_i32, %c0_i32_0 : i32, i32
  }
  func.func @transform_4(%arg0: i32) -> (i32, i32) {
    %c0_i32 = arith.constant 0 : i32
    %c0_i32_0 = arith.constant 0 : i32
    %c0_i32_1 = arith.constant 0 : i32
    return %c0_i32, %c0_i32_0 : i32, i32
  }
  func.func @transform_5(%arg0: i32) -> (i32, i32) {
    %c0_i32 = arith.constant 0 : i32
    %c0_i32_0 = arith.constant 0 : i32
    %c0_i32_1 = arith.constant 0 : i32
    return %c0_i32, %c0_i32_0 : i32, i32
  }
  func.func @transform_6(%arg0: i32) -> (i32, i32) {
    %c0_i32 = arith.constant 0 : i32
    %c0_i32_0 = arith.constant 0 : i32
    %c0_i32_1 = arith.constant 0 : i32
    return %c0_i32, %c0_i32_0 : i32, i32
  }
  func.func @transform_7(%arg0: i32) -> (i32, i32) {
    %c0_i32 = arith.constant 0 : i32
    %c0_i32_0 = arith.constant 0 : i32
    return %arg0, %c0_i32 : i32, i32
  }
}

module attributes {stable_mosaic.version = 11 : i64} {
  func.func @_fused_mlp_kernel(%arg0: i32, %arg1: memref<16x128xf32, #tpu.memory_space<vmem>>, %arg2: memref<128x128xbf16, #tpu.memory_space<vmem>>, %arg3: memref<1x128xf32, #tpu.memory_space<vmem>>, %arg4: memref<128x128xbf16, #tpu.memory_space<vmem>>, %arg5: memref<1x128xf32, #tpu.memory_space<vmem>>, %arg6: memref<128x128xbf16, #tpu.memory_space<vmem>>, %arg7: memref<1x128xf32, #tpu.memory_space<vmem>>, %arg8: memref<16x128xf32, #tpu.memory_space<vmem>>) attributes {dimension_semantics = [#tpu.dimension_semantics<parallel>], iteration_bounds = array<i64: 1>, scalar_prefetch = 0 : i64, scratch_operands = 0 : i64, tpu.core_type = #tpu.core_type<tc>, window_params = [{transform_indices = @transform_0, window_bounds = array<i64: 16, 128>}, {pipeline_mode = #tpu.pipeline_mode<synchronous>, transform_indices = @transform_1, window_bounds = array<i64: 128, 128>}, {pipeline_mode = #tpu.pipeline_mode<synchronous>, transform_indices = @transform_2, window_bounds = array<i64: 1, 128>}, {pipeline_mode = #tpu.pipeline_mode<synchronous>, transform_indices = @transform_3, window_bounds = array<i64: 128, 128>}, {pipeline_mode = #tpu.pipeline_mode<synchronous>, transform_indices = @transform_4, window_bounds = array<i64: 1, 128>}, {pipeline_mode = #tpu.pipeline_mode<synchronous>, transform_indices = @transform_5, window_bounds = array<i64: 128, 128>}, {pipeline_mode = #tpu.pipeline_mode<synchronous>, transform_indices = @transform_6, window_bounds = array<i64: 1, 128>}, {transform_indices = @transform_7, window_bounds = array<i64: 16, 128>}]} {
    %c0 = arith.constant 0 : index
    %c0_0 = arith.constant 0 : index
    %0 = vector.load %arg1[%c0, %c0_0] : memref<16x128xf32, #tpu.memory_space<vmem>>, vector<16x128xf32>
    %1 = arith.truncf %0 : vector<16x128xf32> to vector<16x128xbf16>
    %c0_1 = arith.constant 0 : index
    %c0_2 = arith.constant 0 : index
    %2 = vector.load %arg2[%c0_1, %c0_2] : memref<128x128xbf16, #tpu.memory_space<vmem>>, vector<128x128xbf16>
    %cst = arith.constant dense<0.000000e+00> : vector<16x128xf32>
    %3 = tpu.matmul %1, %2, %cst {dimension_numbers = #tpu.dot_dimension_numbers<[1], [0], [0], [1], [0, 0, 1, 1], [], []>} : vector<16x128xbf16>, vector<128x128xbf16>, vector<16x128xf32> -> vector<16x128xf32>
    %c0_3 = arith.constant 0 : index
    %c0_4 = arith.constant 0 : index
    %4 = vector.load %arg3[%c0_3, %c0_4] : memref<1x128xf32, #tpu.memory_space<vmem>>, vector<1x128xf32>
    %5 = vector.broadcast %4 : vector<1x128xf32> to vector<16x128xf32>
    %6 = arith.addf %3, %5 : vector<16x128xf32>
    %cst_5 = arith.constant 0.000000e+00 : f32
    %7 = vector.broadcast %cst_5 : f32 to vector<16x128xf32>
    %8 = arith.maximumf %6, %7 : vector<16x128xf32>
    %9 = arith.truncf %8 : vector<16x128xf32> to vector<16x128xbf16>
    %c0_6 = arith.constant 0 : index
    %c0_7 = arith.constant 0 : index
    %10 = vector.load %arg4[%c0_6, %c0_7] : memref<128x128xbf16, #tpu.memory_space<vmem>>, vector<128x128xbf16>
    %cst_8 = arith.constant dense<0.000000e+00> : vector<16x128xf32>
    %11 = tpu.matmul %9, %10, %cst_8 {dimension_numbers = #tpu.dot_dimension_numbers<[1], [0], [0], [1], [0, 0, 1, 1], [], []>} : vector<16x128xbf16>, vector<128x128xbf16>, vector<16x128xf32> -> vector<16x128xf32>
    %c0_9 = arith.constant 0 : index
    %c0_10 = arith.constant 0 : index
    %12 = vector.load %arg5[%c0_9, %c0_10] : memref<1x128xf32, #tpu.memory_space<vmem>>, vector<1x128xf32>
    %13 = vector.broadcast %12 : vector<1x128xf32> to vector<16x128xf32>
    %14 = arith.addf %11, %13 : vector<16x128xf32>
    %cst_11 = arith.constant 0.000000e+00 : f32
    %15 = vector.broadcast %cst_11 : f32 to vector<16x128xf32>
    %16 = arith.maximumf %14, %15 : vector<16x128xf32>
    %17 = arith.truncf %16 : vector<16x128xf32> to vector<16x128xbf16>
    %c0_12 = arith.constant 0 : index
    %c0_13 = arith.constant 0 : index
    %18 = vector.load %arg6[%c0_12, %c0_13] : memref<128x128xbf16, #tpu.memory_space<vmem>>, vector<128x128xbf16>
    %cst_14 = arith.constant dense<0.000000e+00> : vector<16x128xf32>
    %19 = tpu.matmul %17, %18, %cst_14 {dimension_numbers = #tpu.dot_dimension_numbers<[1], [0], [0], [1], [0, 0, 1, 1], [], []>} : vector<16x128xbf16>, vector<128x128xbf16>, vector<16x128xf32> -> vector<16x128xf32>
    %c0_15 = arith.constant 0 : index
    %c0_16 = arith.constant 0 : index
    %20 = vector.load %arg7[%c0_15, %c0_16] : memref<1x128xf32, #tpu.memory_space<vmem>>, vector<1x128xf32>
    %21 = vector.broadcast %20 : vector<1x128xf32> to vector<16x128xf32>
    %22 = arith.addf %19, %21 : vector<16x128xf32>
    %c0_17 = arith.constant 0 : index
    %c0_18 = arith.constant 0 : index
    %23 = vector.load %arg8[%c0_17, %c0_18] : memref<16x128xf32, #tpu.memory_space<vmem>>, vector<16x128xf32>
    tpu.vector_store %arg8[%c0_17, %c0_18], %22 {strides = array<i32>} : memref<16x128xf32, #tpu.memory_space<vmem>>, vector<16x128xf32>,
    return
  }
  func.func @transform_0(%arg0: i32) -> (i32, i32) {
    %c0_i32 = arith.constant 0 : i32
    %c0_i32_0 = arith.constant 0 : i32
    return %arg0, %c0_i32 : i32, i32
  }
  func.func @transform_1(%arg0: i32) -> (i32, i32) {
    %c0_i32 = arith.constant 0 : i32
    %c0_i32_0 = arith.constant 0 : i32
    %c0_i32_1 = arith.constant 0 : i32
    return %c0_i32, %c0_i32_0 : i32, i32
  }
  func.func @transform_2(%arg0: i32) -> (i32, i32) {
    %c0_i32 = arith.constant 0 : i32
    %c0_i32_0 = arith.constant 0 : i32
    %c0_i32_1 = arith.constant 0 : i32
    return %c0_i32, %c0_i32_0 : i32, i32
  }
  func.func @transform_3(%arg0: i32) -> (i32, i32) {
    %c0_i32 = arith.constant 0 : i32
    %c0_i32_0 = arith.constant 0 : i32
    %c0_i32_1 = arith.constant 0 : i32
    return %c0_i32, %c0_i32_0 : i32, i32
  }
  func.func @transform_4(%arg0: i32) -> (i32, i32) {
    %c0_i32 = arith.constant 0 : i32
    %c0_i32_0 = arith.constant 0 : i32
    %c0_i32_1 = arith.constant 0 : i32
    return %c0_i32, %c0_i32_0 : i32, i32
  }
  func.func @transform_5(%arg0: i32) -> (i32, i32) {
    %c0_i32 = arith.constant 0 : i32
    %c0_i32_0 = arith.constant 0 : i32
    %c0_i32_1 = arith.constant 0 : i32
    return %c0_i32, %c0_i32_0 : i32, i32
  }
  func.func @transform_6(%arg0: i32) -> (i32, i32) {
    %c0_i32 = arith.constant 0 : i32
    %c0_i32_0 = arith.constant 0 : i32
    %c0_i32_1 = arith.constant 0 : i32
    return %c0_i32, %c0_i32_0 : i32, i32
  }
  func.func @transform_7(%arg0: i32) -> (i32, i32) {
    %c0_i32 = arith.constant 0 : i32
    %c0_i32_0 = arith.constant 0 : i32
    return %arg0, %c0_i32 : i32, i32
  }
}

</mosaic_0001>

<llo_original>
// kernel: tpu_custom_call.1
$region0: #{tpu_custom_call.1}
  #allocation0 [shape = 'u32[]', space=smem, size = 0x4, offset = 0x4, fixed_abs, tag = 'smem constant byte address 0x4 - core index']
  #allocation1 [shape = 'u32[144,128]{1,0:T(1,128)}', space=vmem, size = 0x12000, scoped, tag = 'internal scratch']
  %s0 = inlined_call_operand.hbm [shape: f32[16,128], index: 0, kind: input, shape index: {}]
  %s1 = inlined_call_operand.hbm [shape: bf16[128,128], index: 1, kind: input, shape index: {}]
  %s2 = inlined_call_operand.vmem [shape: f32[1,128], index: 2, kind: input, shape index: {}]
  %s3 = inlined_call_operand.hbm [shape: bf16[128,128], index: 3, kind: input, shape index: {}]
  %s4 = inlined_call_operand.vmem [shape: f32[1,128], index: 4, kind: input, shape index: {}]
  %s5 = inlined_call_operand.hbm [shape: bf16[128,128], index: 5, kind: input, shape index: {}]
  %s6 = inlined_call_operand.vmem [shape: f32[1,128], index: 6, kind: input, shape index: {}]
  %s7 = inlined_call_operand.hbm [shape: f32[16,128], index: 7, kind: output, shape index: {}]
  %s8 = sld [smem:[#allocation0]]
  $region54: #{tpu_custom_call.1} parent=0
    _
  %s10 = ssub.s32 1, %s8
  %s11 = scalar_select 0, %s10, %s8
  $region1: #{tpu_custom_call.1} parent=0
    #allocation2 [shape = 'u8[8192]{0}', space=vmem, size = 0x2000, scoped, tag = 'input window, operand 0, single buffered']
    #allocation3 [shape = 's32[1]{0}', space=sflag, size = 0x4, scoped, tag = 'scoped memory for tpu_custom_call.1']
    #allocation4 [shape = 's32[1]{0}', space=sflag, size = 0x4, scoped, tag = 'scoped memory for tpu_custom_call.1']
    #allocation5 [shape = 'u8[32768]{0}', space=vmem, size = 0x8000, scoped, tag = 'input window, operand 1, single buffered']
    #allocation6 [shape = 's32[1]{0}', space=sflag, size = 0x4, scoped, tag = 'scoped memory for tpu_custom_call.1']
    #allocation7 [shape = 'u8[32768]{0}', space=vmem, size = 0x8000, scoped, tag = 'input window, operand 3, single buffered']
    #allocation8 [shape = 'u8[32768]{0}', space=vmem, size = 0x8000, scoped, tag = 'input window, operand 5, single buffered']
    #allocation9 [shape = 's32[1]{0}', space=sflag, size = 0x4, scoped, tag = 'scoped memory for tpu_custom_call.1']
    #allocation10 [shape = 'u8[8192]{0}', space=vmem, size = 0x2000, scoped, tag = 'output window, operand 0, single buffered']
    %12 = vsyncpa [#allocation3], 0
    %13 = vsyncpa [#allocation6], 0
    %14 = vsyncpa [#allocation9], 0
    %15 = vsyncpa [#allocation4], 0
    // Predicated region
    $region2: #{tpu_custom_call.1} parent=1 // pred_check
      _
    $region3: #{tpu_custom_call.1} parent=1 // pred_check_branch
      %17 = sbr.rel (0) target = $region5
    $region4: #{tpu_custom_call.1} parent=1 // pred_region
      %s19 = ssub.s32 256, 256
      %20 = vsyncadd [#allocation3], %s19
      %s21 = sshll.u32 [#allocation2], 4
      %s22 = int_to_ptr.vmem [resolvable:$true] %s21
      %27 = dma.hbm_to_vmem [thread:$0]  %s0, 256, %s22, [#allocation3], 128, 128, 8
    $region5: #{tpu_custom_call.1} parent=1 // pred_fallthru
      _
    // Predicated region
    $region6: #{tpu_custom_call.1} parent=1 // pred_check
      _
    $region7: #{tpu_custom_call.1} parent=1 // pred_check_branch
      %29 = sbr.rel (0) target = $region9
    $region8: #{tpu_custom_call.1} parent=1 // pred_region
      %s31 = ssub.s32 1024, 1024
      %32 = vsyncadd [#allocation6], %s31
      %s33 = sshll.u32 [#allocation5], 4
      %s34 = int_to_ptr.vmem [resolvable:$true] %s33
      %39 = dma.hbm_to_vmem [thread:$0]  %s1, 1024, %s34, [#allocation6], 64, 64, 4
    $region9: #{tpu_custom_call.1} parent=1 // pred_fallthru
      _
    // Predicated region
    $region10: #{tpu_custom_call.1} parent=1 // pred_check
      _
    $region11: #{tpu_custom_call.1} parent=1 // pred_check_branch
      %41 = sbr.rel (0) target = $region13
    $region12: #{tpu_custom_call.1} parent=1 // pred_region
      _
    $region13: #{tpu_custom_call.1} parent=1 // pred_fallthru
      _
    // Predicated region
    $region14: #{tpu_custom_call.1} parent=1 // pred_check
      _
    $region15: #{tpu_custom_call.1} parent=1 // pred_check_branch
      %43 = sbr.rel (0) target = $region17
    $region16: #{tpu_custom_call.1} parent=1 // pred_region
      %s45 = ssub.s32 1024, 1024
      %46 = vsyncadd [#allocation6], %s45
      %s47 = sshll.u32 [#allocation7], 4
      %s48 = int_to_ptr.vmem [resolvable:$true] %s47
      %53 = dma.hbm_to_vmem [thread:$0]  %s3, 1024, %s48, [#allocation6], 64, 64, 4
    $region17: #{tpu_custom_call.1} parent=1 // pred_fallthru
      _
    // Predicated region
    $region18: #{tpu_custom_call.1} parent=1 // pred_check
      _
    $region19: #{tpu_custom_call.1} parent=1 // pred_check_branch
      %55 = sbr.rel (0) target = $region21
    $region20: #{tpu_custom_call.1} parent=1 // pred_region
      _
    $region21: #{tpu_custom_call.1} parent=1 // pred_fallthru
      _
    // Predicated region
    $region22: #{tpu_custom_call.1} parent=1 // pred_check
      _
    $region23: #{tpu_custom_call.1} parent=1 // pred_check_branch
      %57 = sbr.rel (0) target = $region25
    $region24: #{tpu_custom_call.1} parent=1 // pred_region
      %s59 = ssub.s32 1024, 1024
      %60 = vsyncadd [#allocation9], %s59
      %s61 = sshll.u32 [#allocation8], 4
      %s62 = int_to_ptr.vmem [resolvable:$true] %s61
      %67 = dma.hbm_to_vmem [thread:$0]  %s5, 1024, %s62, [#allocation9], 64, 64, 4
    $region25: #{tpu_custom_call.1} parent=1 // pred_fallthru
      _
    // Predicated region
    $region26: #{tpu_custom_call.1} parent=1 // pred_check
      _
    $region27: #{tpu_custom_call.1} parent=1 // pred_check_branch
      %69 = sbr.rel (0) target = $region29
    $region28: #{tpu_custom_call.1} parent=1 // pred_region
      _
    $region29: #{tpu_custom_call.1} parent=1 // pred_fallthru
      _
    // Predicated region
    $region30: #{tpu_custom_call.1} parent=1 // pred_check
      _
    $region31: #{tpu_custom_call.1} parent=1 // pred_check_branch
      %71 = sbr.rel (0) target = $region33
    $region32: #{tpu_custom_call.1} parent=1 // pred_region
      %72 = dma.done [#allocation3], 256
    $region33: #{tpu_custom_call.1} parent=1 // pred_fallthru
      _
    // Predicated region
    $region34: #{tpu_custom_call.1} parent=1 // pred_check
      _
    $region35: #{tpu_custom_call.1} parent=1 // pred_check_branch
      %74 = sbr.rel (0) target = $region37
    $region36: #{tpu_custom_call.1} parent=1 // pred_region
      %75 = dma.done [#allocation6], 1024
    $region37: #{tpu_custom_call.1} parent=1 // pred_fallthru
      _
    // Predicated region
    $region38: #{tpu_custom_call.1} parent=1 // pred_check
      _
    $region39: #{tpu_custom_call.1} parent=1 // pred_check_branch
      %77 = sbr.rel (0) target = $region41
    $region40: #{tpu_custom_call.1} parent=1 // pred_region
      %78 = dma.done [#allocation6], 1024
    $region41: #{tpu_custom_call.1} parent=1 // pred_fallthru
      _
    // Predicated region
    $region42: #{tpu_custom_call.1} parent=1 // pred_check
      _
    $region43: #{tpu_custom_call.1} parent=1 // pred_check_branch
      %80 = sbr.rel (0) target = $region45
    $region44: #{tpu_custom_call.1} parent=1 // pred_region
      %81 = dma.done [#allocation9], 1024
    $region45: #{tpu_custom_call.1} parent=1 // pred_fallthru
      _
    %v83 = vld [vmem:[#allocation2] sm:$0xff]
    %v84 = vld [vmem:[#allocation2 + $0x8] sm:$0xff]
    %v85 = vpack.c.bf16 %v84, %v83
    %v86 = vld [vmem:[#allocation5] sm:$0xf]
    %v87 = vld [vmem:[#allocation5 + $0x4] sm:$0xf]
    %v88 = vld [vmem:[#allocation5 + $0x8] sm:$0xf]
    %v89 = vld [vmem:[#allocation5 + $0xc] sm:$0xf]
    %v90 = vld [vmem:[#allocation5 + $0x10] sm:$0xf]
    %v91 = vld [vmem:[#allocation5 + $0x14] sm:$0xf]
    %v92 = vld [vmem:[#allocation5 + $0x18] sm:$0xf]
    %v93 = vld [vmem:[#allocation5 + $0x1c] sm:$0xf]
    %v94 = vld [vmem:[#allocation5 + $0x20] sm:$0xf]
    %v95 = vld [vmem:[#allocation5 + $0x24] sm:$0xf]
    %v96 = vld [vmem:[#allocation5 + $0x28] sm:$0xf]
    %v97 = vld [vmem:[#allocation5 + $0x2c] sm:$0xf]
    %v98 = vld [vmem:[#allocation5 + $0x30] sm:$0xf]
    %v99 = vld [vmem:[#allocation5 + $0x34] sm:$0xf]
    %v100 = vld [vmem:[#allocation5 + $0x38] sm:$0xf]
    %v101 = vld [vmem:[#allocation5 + $0x3c] sm:$0xf]
    %v102 = vld [vmem:[%s2] sm:$0x1]
    %v104 = vlaneseq
    %v105 = vshrl.u32 %v104, 7
    %v106 = vsub.s32 0, %v105
    %v107 = vrot.slane %v102, %v106
    %v125 = vunpack.c.l.b16 %v86
    %v126 = vunpack.c.l.b16 %v87
    %v127 = vunpack.c.l.b16 %v88
    %v128 = vunpack.c.l.b16 %v89
    %v129 = vunpack.c.l.b16 %v90
    %v130 = vunpack.c.l.b16 %v91
    %v131 = vunpack.c.l.b16 %v92
    %v132 = vunpack.c.l.b16 %v93
    %v133 = vunpack.c.l.b16 %v94
    %v134 = vunpack.c.l.b16 %v95
    %v135 = vunpack.c.l.b16 %v96
    %v136 = vunpack.c.l.b16 %v97
    %v137 = vunpack.c.l.b16 %v98
    %v138 = vunpack.c.l.b16 %v99
    %v139 = vunpack.c.l.b16 %v100
    %v140 = vunpack.c.l.b16 %v101
    %v141 = vpack.c.b16 %v126, %v125
    %v142 = vpack.c.b16 %v128, %v127
    %v143 = vpack.c.b16 %v130, %v129
    %v144 = vpack.c.b16 %v132, %v131
    %v145 = vpack.c.b16 %v134, %v133
    %v146 = vpack.c.b16 %v136, %v135
    %v147 = vpack.c.b16 %v138, %v137
    %v148 = vpack.c.b16 %v140, %v139
    %157 = vmatprep.subr.bf16.mxu0 0
    %158 = vmatpush1.bf16.msra.mxu0 %v148
    %159 = vmatprep.subr.bf16.mxu0 0
    %160 = vmatpush1.bf16.msra.mxu0 %v147
    %161 = vmatprep.subr.bf16.mxu0 0
    %162 = vmatpush1.bf16.msra.mxu0 %v146
    %163 = vmatprep.subr.bf16.mxu0 0
    %164 = vmatpush1.bf16.msra.mxu0 %v145
    %165 = vmatprep.subr.bf16.mxu0 0
    %166 = vmatpush1.bf16.msra.mxu0 %v144
    %167 = vmatprep.subr.bf16.mxu0 0
    %168 = vmatpush1.bf16.msra.mxu0 %v143
    %169 = vmatprep.subr.bf16.mxu0 0
    %170 = vmatpush1.bf16.msra.mxu0 %v142
    %171 = vmatprep.subr.bf16.mxu0 0
    %172 = vmatpush1.bf16.msra.mxu0 %v141
    %173 = vmatprep.subr.bf16.mxu0 0
    %174 = vmatpush2.bf16.msra.mxu0 0
    %175 = vmatprep.subr.bf16.mxu0 0
    %176 = vmatpush2.bf16.msra.mxu0 0
    %177 = vmatprep.subr.bf16.mxu0 0
    %178 = vmatpush2.bf16.msra.mxu0 0
    %179 = vmatprep.subr.bf16.mxu0 0
    %180 = vmatpush2.bf16.msra.mxu0 0
    %181 = vmatprep.subr.bf16.mxu0 0
    %182 = vmatpush2.bf16.msra.mxu0 0
    %183 = vmatprep.subr.bf16.mxu0 0
    %184 = vmatpush2.bf16.msra.mxu0 0
    %185 = vmatprep.subr.bf16.mxu0 0
    %186 = vmatpush2.bf16.msra.mxu0 0
    %187 = vmatprep.subr.bf16.mxu0 0
    %188 = vmatpush2.bf16.msra.mxu0 0
    %189 = vmatprep.mubr.bf16.mxu0 0
    %190 = vmatmul.mubr.bf16.gmra.mxu0 %v85
    %v191 = vpop.f32.mrf.mxu0
    %v192 = vadd.f32 %v107, %v191
    %v193 = vpop.f32.mrf.mxu0
    %v194 = vpop.f32.mrf.mxu0
    %v195 = vadd.f32 %v107, %v194
    %v196 = vpop.f32.mrf.mxu0
    %197 = vdwg.mxu0
    %v198 = vmax.f32 %v192, 0.0
    %v199 = vmax.f32 %v195, 0.0
    %v200 = vpack.c.bf16 %v199, %v198
    %v201 = vld [vmem:[#allocation7] sm:$0xf]
    %v202 = vld [vmem:[#allocation7 + $0x4] sm:$0xf]
    %v203 = vld [vmem:[#allocation7 + $0x8] sm:$0xf]
    %v204 = vld [vmem:[#allocation7 + $0xc] sm:$0xf]
    %v205 = vld [vmem:[#allocation7 + $0x10] sm:$0xf]
    %v206 = vld [vmem:[#allocation7 + $0x14] sm:$0xf]
    %v207 = vld [vmem:[#allocation7 + $0x18] sm:$0xf]
    %v208 = vld [vmem:[#allocation7 + $0x1c] sm:$0xf]
    %v209 = vld [vmem:[#allocation7 + $0x20] sm:$0xf]
    %v210 = vld [vmem:[#allocation7 + $0x24] sm:$0xf]
    %v211 = vld [vmem:[#allocation7 + $0x28] sm:$0xf]
    %v212 = vld [vmem:[#allocation7 + $0x2c] sm:$0xf]
    %v213 = vld [vmem:[#allocation7 + $0x30] sm:$0xf]
    %v214 = vld [vmem:[#allocation7 + $0x34] sm:$0xf]
    %v215 = vld [vmem:[#allocation7 + $0x38] sm:$0xf]
    %v216 = vld [vmem:[#allocation7 + $0x3c] sm:$0xf]
    %v217 = vld [vmem:[%s4] sm:$0x1]
    %v219 = vlaneseq
    %v220 = vshrl.u32 %v219, 7
    %v221 = vsub.s32 0, %v220
    %v222 = vrot.slane %v217, %v221
    %v240 = vunpack.c.l.b16 %v201
    %v241 = vunpack.c.l.b16 %v202
    %v242 = vunpack.c.l.b16 %v203
    %v243 = vunpack.c.l.b16 %v204
    %v244 = vunpack.c.l.b16 %v205
    %v245 = vunpack.c.l.b16 %v206
    %v246 = vunpack.c.l.b16 %v207
    %v247 = vunpack.c.l.b16 %v208
    %v248 = vunpack.c.l.b16 %v209
    %v249 = vunpack.c.l.b16 %v210
    %v250 = vunpack.c.l.b16 %v211
    %v251 = vunpack.c.l.b16 %v212
    %v252 = vunpack.c.l.b16 %v213
    %v253 = vunpack.c.l.b16 %v214
    %v254 = vunpack.c.l.b16 %v215
    %v255 = vunpack.c.l.b16 %v216
    %v256 = vpack.c.b16 %v241, %v240
    %v257 = vpack.c.b16 %v243, %v242
    %v258 = vpack.c.b16 %v245, %v244
    %v259 = vpack.c.b16 %v247, %v246
    %v260 = vpack.c.b16 %v249, %v248
    %v261 = vpack.c.b16 %v251, %v250
    %v262 = vpack.c.b16 %v253, %v252
    %v263 = vpack.c.b16 %v255, %v254
    %272 = vmatprep.subr.bf16.mxu0 0
    %273 = vmatpush1.bf16.msra.mxu0 %v263
    %274 = vmatprep.subr.bf16.mxu0 0
    %275 = vmatpush1.bf16.msra.mxu0 %v262
    %276 = vmatprep.subr.bf16.mxu0 0
    %277 = vmatpush1.bf16.msra.mxu0 %v261
    %278 = vmatprep.subr.bf16.mxu0 0
    %279 = vmatpush1.bf16.msra.mxu0 %v260
    %280 = vmatprep.subr.bf16.mxu0 0
    %281 = vmatpush1.bf16.msra.mxu0 %v259
    %282 = vmatprep.subr.bf16.mxu0 0
    %283 = vmatpush1.bf16.msra.mxu0 %v258
    %284 = vmatprep.subr.bf16.mxu0 0
    %285 = vmatpush1.bf16.msra.mxu0 %v257
    %286 = vmatprep.subr.bf16.mxu0 0
    %287 = vmatpush1.bf16.msra.mxu0 %v256
    %288 = vmatprep.subr.bf16.mxu0 0
    %289 = vmatpush2.bf16.msra.mxu0 0
    %290 = vmatprep.subr.bf16.mxu0 0
    %291 = vmatpush2.bf16.msra.mxu0 0
    %292 = vmatprep.subr.bf16.mxu0 0
    %293 = vmatpush2.bf16.msra.mxu0 0
    %294 = vmatprep.subr.bf16.mxu0 0
    %295 = vmatpush2.bf16.msra.mxu0 0
    %296 = vmatprep.subr.bf16.mxu0 0
    %297 = vmatpush2.bf16.msra.mxu0 0
    %298 = vmatprep.subr.bf16.mxu0 0
    %299 = vmatpush2.bf16.msra.mxu0 0
    %300 = vmatprep.subr.bf16.mxu0 0
    %301 = vmatpush2.bf16.msra.mxu0 0
    %302 = vmatprep.subr.bf16.mxu0 0
    %303 = vmatpush2.bf16.msra.mxu0 0
    %304 = vmatprep.mubr.bf16.mxu0 0
    %305 = vmatmul.mubr.bf16.gmra.mxu0 %v200
    %v306 = vpop.f32.mrf.mxu0
    %v307 = vadd.f32 %v222, %v306
    %v308 = vpop.f32.mrf.mxu0
    %v309 = vpop.f32.mrf.mxu0
    %v310 = vadd.f32 %v222, %v309
    %v311 = vpop.f32.mrf.mxu0
    %312 = vdwg.mxu0
    %v313 = vmax.f32 %v307, 0.0
    %v314 = vmax.f32 %v310, 0.0
    %v315 = vpack.c.bf16 %v314, %v313
    %v316 = vld [vmem:[#allocation8] sm:$0xf]
    %v317 = vld [vmem:[#allocation8 + $0x4] sm:$0xf]
    %v318 = vld [vmem:[#allocation8 + $0x8] sm:$0xf]
    %v319 = vld [vmem:[#allocation8 + $0xc] sm:$0xf]
    %v320 = vld [vmem:[#allocation8 + $0x10] sm:$0xf]
    %v321 = vld [vmem:[#allocation8 + $0x14] sm:$0xf]
    %v322 = vld [vmem:[#allocation8 + $0x18] sm:$0xf]
    %v323 = vld [vmem:[#allocation8 + $0x1c] sm:$0xf]
    %v324 = vld [vmem:[#allocation8 + $0x20] sm:$0xf]
    %v325 = vld [vmem:[#allocation8 + $0x24] sm:$0xf]
    %v326 = vld [vmem:[#allocation8 + $0x28] sm:$0xf]
    %v327 = vld [vmem:[#allocation8 + $0x2c] sm:$0xf]
    %v328 = vld [vmem:[#allocation8 + $0x30] sm:$0xf]
    %v329 = vld [vmem:[#allocation8 + $0x34] sm:$0xf]
    %v330 = vld [vmem:[#allocation8 + $0x38] sm:$0xf]
    %v331 = vld [vmem:[#allocation8 + $0x3c] sm:$0xf]
    %v332 = vld [vmem:[%s6] sm:$0x1]
    %v334 = vlaneseq
    %v335 = vshrl.u32 %v334, 7
    %v336 = vsub.s32 0, %v335
    %v337 = vrot.slane %v332, %v336
    %v355 = vunpack.c.l.b16 %v316
    %v356 = vunpack.c.l.b16 %v317
    %v357 = vunpack.c.l.b16 %v318
    %v358 = vunpack.c.l.b16 %v319
    %v359 = vunpack.c.l.b16 %v320
    %v360 = vunpack.c.l.b16 %v321
    %v361 = vunpack.c.l.b16 %v322
    %v362 = vunpack.c.l.b16 %v323
    %v363 = vunpack.c.l.b16 %v324
    %v364 = vunpack.c.l.b16 %v325
    %v365 = vunpack.c.l.b16 %v326
    %v366 = vunpack.c.l.b16 %v327
    %v367 = vunpack.c.l.b16 %v328
    %v368 = vunpack.c.l.b16 %v329
    %v369 = vunpack.c.l.b16 %v330
    %v370 = vunpack.c.l.b16 %v331
    %v371 = vpack.c.b16 %v356, %v355
    %v372 = vpack.c.b16 %v358, %v357
    %v373 = vpack.c.b16 %v360, %v359
    %v374 = vpack.c.b16 %v362, %v361
    %v375 = vpack.c.b16 %v364, %v363
    %v376 = vpack.c.b16 %v366, %v365
    %v377 = vpack.c.b16 %v368, %v367
    %v378 = vpack.c.b16 %v370, %v369
    %387 = vmatprep.subr.bf16.mxu0 0
    %388 = vmatpush1.bf16.msra.mxu0 %v378
    %389 = vmatprep.subr.bf16.mxu0 0
    %390 = vmatpush1.bf16.msra.mxu0 %v377
    %391 = vmatprep.subr.bf16.mxu0 0
    %392 = vmatpush1.bf16.msra.mxu0 %v376
    %393 = vmatprep.subr.bf16.mxu0 0
    %394 = vmatpush1.bf16.msra.mxu0 %v375
    %395 = vmatprep.subr.bf16.mxu0 0
    %396 = vmatpush1.bf16.msra.mxu0 %v374
    %397 = vmatprep.subr.bf16.mxu0 0
    %398 = vmatpush1.bf16.msra.mxu0 %v373
    %399 = vmatprep.subr.bf16.mxu0 0
    %400 = vmatpush1.bf16.msra.mxu0 %v372
    %401 = vmatprep.subr.bf16.mxu0 0
    %402 = vmatpush1.bf16.msra.mxu0 %v371
    %403 = vmatprep.subr.bf16.mxu0 0
    %404 = vmatpush2.bf16.msra.mxu0 0
    %405 = vmatprep.subr.bf16.mxu0 0
    %406 = vmatpush2.bf16.msra.mxu0 0
    %407 = vmatprep.subr.bf16.mxu0 0
    %408 = vmatpush2.bf16.msra.mxu0 0
    %409 = vmatprep.subr.bf16.mxu0 0
    %410 = vmatpush2.bf16.msra.mxu0 0
    %411 = vmatprep.subr.bf16.mxu0 0
    %412 = vmatpush2.bf16.msra.mxu0 0
    %413 = vmatprep.subr.bf16.mxu0 0
    %414 = vmatpush2.bf16.msra.mxu0 0
    %415 = vmatprep.subr.bf16.mxu0 0
    %416 = vmatpush2.bf16.msra.mxu0 0
    %417 = vmatprep.subr.bf16.mxu0 0
    %418 = vmatpush2.bf16.msra.mxu0 0
    %419 = vmatprep.mubr.bf16.mxu0 0
    %420 = vmatmul.mubr.bf16.gmra.mxu0 %v315
    %v421 = vpop.f32.mrf.mxu0
    %v422 = vadd.f32 %v337, %v421
    %v423 = vpop.f32.mrf.mxu0
    %v424 = vpop.f32.mrf.mxu0
    %v425 = vadd.f32 %v337, %v424
    %v426 = vpop.f32.mrf.mxu0
    %427 = vdwg.mxu0
    %428 = vst [vmem:[#allocation10] sm:$0xff] %v422
    %429 = vst [vmem:[#allocation10 + $0x8] sm:$0xff] %v425
    // Predicated region
    $region46: #{tpu_custom_call.1} parent=1 // pred_check
      _
    $region47: #{tpu_custom_call.1} parent=1 // pred_check_branch
      %431 = sbr.rel (0) target = $region49
    $region48: #{tpu_custom_call.1} parent=1 // pred_region
      %s433 = ssub.s32 256, 256
      %434 = vsyncadd [#allocation4], %s433
      %s435 = sshll.u32 [#allocation10], 4
      %s436 = int_to_ptr.vmem [resolvable:$true] %s435
      %441 = dma.vmem_to_hbm [thread:$0]  %s436, 256, %s7, [#allocation4], 128, 128, 8
    $region49: #{tpu_custom_call.1} parent=1 // pred_fallthru
      _
    // Predicated region
    $region50: #{tpu_custom_call.1} parent=1 // pred_check
      _
    $region51: #{tpu_custom_call.1} parent=1 // pred_check_branch
      %443 = sbr.rel (0) target = $region53
    $region52: #{tpu_custom_call.1} parent=1 // pred_region
      %444 = dma.done [#allocation4], 256
    $region53: #{tpu_custom_call.1} parent=1 // pred_fallthru
      _
    %445 = vsyncpa [#allocation3], 1
    %446 = vsyncpa [#allocation6], 1
    %447 = vsyncpa [#allocation9], 1
    %448 = vsyncpa [#allocation4], 1

// kernel: tpu_custom_call.1
$region0: #{tpu_custom_call.1}
  #allocation0 [shape = 'u32[]', space=smem, size = 0x4, offset = 0x4, fixed_abs, tag = 'smem constant byte address 0x4 - core index']
  #allocation1 [shape = 'u32[144,128]{1,0:T(1,128)}', space=vmem, size = 0x12000, scoped, tag = 'internal scratch']
  %s0 = inlined_call_operand.hbm [shape: f32[16,128], index: 0, kind: input, shape index: {}]
  %s1 = inlined_call_operand.hbm [shape: bf16[128,128], index: 1, kind: input, shape index: {}]
  %s2 = inlined_call_operand.vmem [shape: f32[1,128], index: 2, kind: input, shape index: {}]
  %s3 = inlined_call_operand.hbm [shape: bf16[128,128], index: 3, kind: input, shape index: {}]
  %s4 = inlined_call_operand.vmem [shape: f32[1,128], index: 4, kind: input, shape index: {}]
  %s5 = inlined_call_operand.hbm [shape: bf16[128,128], index: 5, kind: input, shape index: {}]
  %s6 = inlined_call_operand.vmem [shape: f32[1,128], index: 6, kind: input, shape index: {}]
  %s7 = inlined_call_operand.hbm [shape: f32[16,128], index: 7, kind: output, shape index: {}]
  %s8 = sld [smem:[#allocation0]]
  $region54: #{tpu_custom_call.1} parent=0
    _
  %s10 = ssub.s32 1, %s8
  %s11 = scalar_select 0, %s10, %s8
  $region1: #{tpu_custom_call.1} parent=0
    #allocation2 [shape = 'u8[8192]{0}', space=vmem, size = 0x2000, scoped, tag = 'input window, operand 0, single buffered']
    #allocation3 [shape = 's32[1]{0}', space=sflag, size = 0x4, scoped, tag = 'scoped memory for tpu_custom_call.1']
    #allocation4 [shape = 's32[1]{0}', space=sflag, size = 0x4, scoped, tag = 'scoped memory for tpu_custom_call.1']
    #allocation5 [shape = 'u8[32768]{0}', space=vmem, size = 0x8000, scoped, tag = 'input window, operand 1, single buffered']
    #allocation6 [shape = 's32[1]{0}', space=sflag, size = 0x4, scoped, tag = 'scoped memory for tpu_custom_call.1']
    #allocation7 [shape = 'u8[32768]{0}', space=vmem, size = 0x8000, scoped, tag = 'input window, operand 3, single buffered']
    #allocation8 [shape = 'u8[32768]{0}', space=vmem, size = 0x8000, scoped, tag = 'input window, operand 5, single buffered']
    #allocation9 [shape = 's32[1]{0}', space=sflag, size = 0x4, scoped, tag = 'scoped memory for tpu_custom_call.1']
    #allocation10 [shape = 'u8[8192]{0}', space=vmem, size = 0x2000, scoped, tag = 'output window, operand 0, single buffered']
    %12 = vsyncpa [#allocation3], 0
    %13 = vsyncpa [#allocation6], 0
    %14 = vsyncpa [#allocation9], 0
    %15 = vsyncpa [#allocation4], 0
    // Predicated region
    $region2: #{tpu_custom_call.1} parent=1 // pred_check
      _
    $region3: #{tpu_custom_call.1} parent=1 // pred_check_branch
      %17 = sbr.rel (0) target = $region5
    $region4: #{tpu_custom_call.1} parent=1 // pred_region
      %s19 = ssub.s32 256, 256
      %20 = vsyncadd [#allocation3], %s19
      %s21 = sshll.u32 [#allocation2], 4
      %s22 = int_to_ptr.vmem [resolvable:$true] %s21
      %27 = dma.hbm_to_vmem [thread:$0]  %s0, 256, %s22, [#allocation3], 128, 128, 8
    $region5: #{tpu_custom_call.1} parent=1 // pred_fallthru
      _
    // Predicated region
    $region6: #{tpu_custom_call.1} parent=1 // pred_check
      _
    $region7: #{tpu_custom_call.1} parent=1 // pred_check_branch
      %29 = sbr.rel (0) target = $region9
    $region8: #{tpu_custom_call.1} parent=1 // pred_region
      %s31 = ssub.s32 1024, 1024
      %32 = vsyncadd [#allocation6], %s31
      %s33 = sshll.u32 [#allocation5], 4
      %s34 = int_to_ptr.vmem [resolvable:$true] %s33
      %39 = dma.hbm_to_vmem [thread:$0]  %s1, 1024, %s34, [#allocation6], 64, 64, 4
    $region9: #{tpu_custom_call.1} parent=1 // pred_fallthru
      _
    // Predicated region
    $region10: #{tpu_custom_call.1} parent=1 // pred_check
      _
    $region11: #{tpu_custom_call.1} parent=1 // pred_check_branch
      %41 = sbr.rel (0) target = $region13
    $region12: #{tpu_custom_call.1} parent=1 // pred_region
      _
    $region13: #{tpu_custom_call.1} parent=1 // pred_fallthru
      _
    // Predicated region
    $region14: #{tpu_custom_call.1} parent=1 // pred_check
      _
    $region15: #{tpu_custom_call.1} parent=1 // pred_check_branch
      %43 = sbr.rel (0) target = $region17
    $region16: #{tpu_custom_call.1} parent=1 // pred_region
      %s45 = ssub.s32 1024, 1024
      %46 = vsyncadd [#allocation6], %s45
      %s47 = sshll.u32 [#allocation7], 4
      %s48 = int_to_ptr.vmem [resolvable:$true] %s47
      %53 = dma.hbm_to_vmem [thread:$0]  %s3, 1024, %s48, [#allocation6], 64, 64, 4
    $region17: #{tpu_custom_call.1} parent=1 // pred_fallthru
      _
    // Predicated region
    $region18: #{tpu_custom_call.1} parent=1 // pred_check
      _
    $region19: #{tpu_custom_call.1} parent=1 // pred_check_branch
      %55 = sbr.rel (0) target = $region21
    $region20: #{tpu_custom_call.1} parent=1 // pred_region
      _
    $region21: #{tpu_custom_call.1} parent=1 // pred_fallthru
      _
    // Predicated region
    $region22: #{tpu_custom_call.1} parent=1 // pred_check
      _
    $region23: #{tpu_custom_call.1} parent=1 // pred_check_branch
      %57 = sbr.rel (0) target = $region25
    $region24: #{tpu_custom_call.1} parent=1 // pred_region
      %s59 = ssub.s32 1024, 1024
      %60 = vsyncadd [#allocation9], %s59
      %s61 = sshll.u32 [#allocation8], 4
      %s62 = int_to_ptr.vmem [resolvable:$true] %s61
      %67 = dma.hbm_to_vmem [thread:$0]  %s5, 1024, %s62, [#allocation9], 64, 64, 4
    $region25: #{tpu_custom_call.1} parent=1 // pred_fallthru
      _
    // Predicated region
    $region26: #{tpu_custom_call.1} parent=1 // pred_check
      _
    $region27: #{tpu_custom_call.1} parent=1 // pred_check_branch
      %69 = sbr.rel (0) target = $region29
    $region28: #{tpu_custom_call.1} parent=1 // pred_region
      _
    $region29: #{tpu_custom_call.1} parent=1 // pred_fallthru
      _
    // Predicated region
    $region30: #{tpu_custom_call.1} parent=1 // pred_check
      _
    $region31: #{tpu_custom_call.1} parent=1 // pred_check_branch
      %71 = sbr.rel (0) target = $region33
    $region32: #{tpu_custom_call.1} parent=1 // pred_region
      %72 = dma.done [#allocation3], 256
    $region33: #{tpu_custom_call.1} parent=1 // pred_fallthru
      _
    // Predicated region
    $region34: #{tpu_custom_call.1} parent=1 // pred_check
      _
    $region35: #{tpu_custom_call.1} parent=1 // pred_check_branch
      %74 = sbr.rel (0) target = $region37
    $region36: #{tpu_custom_call.1} parent=1 // pred_region
      %75 = dma.done [#allocation6], 1024
    $region37: #{tpu_custom_call.1} parent=1 // pred_fallthru
      _
    // Predicated region
    $region38: #{tpu_custom_call.1} parent=1 // pred_check
      _
    $region39: #{tpu_custom_call.1} parent=1 // pred_check_branch
      %77 = sbr.rel (0) target = $region41
    $region40: #{tpu_custom_call.1} parent=1 // pred_region
      %78 = dma.done [#allocation6], 1024
    $region41: #{tpu_custom_call.1} parent=1 // pred_fallthru
      _
    // Predicated region
    $region42: #{tpu_custom_call.1} parent=1 // pred_check
      _
    $region43: #{tpu_custom_call.1} parent=1 // pred_check_branch
      %80 = sbr.rel (0) target = $region45
    $region44: #{tpu_custom_call.1} parent=1 // pred_region
      %81 = dma.done [#allocation9], 1024
    $region45: #{tpu_custom_call.1} parent=1 // pred_fallthru
      _
    %v83 = vld [vmem:[#allocation2] sm:$0xff]
    %v84 = vld [vmem:[#allocation2 + $0x8] sm:$0xff]
    %v85 = vpack.c.bf16 %v84, %v83
    %v86 = vld [vmem:[#allocation5] sm:$0xf]
    %v87 = vld [vmem:[#allocation5 + $0x4] sm:$0xf]
    %v88 = vld [vmem:[#allocation5 + $0x8] sm:$0xf]
    %v89 = vld [vmem:[#allocation5 + $0xc] sm:$0xf]
    %v90 = vld [vmem:[#allocation5 + $0x10] sm:$0xf]
    %v91 = vld [vmem:[#allocation5 + $0x14] sm:$0xf]
    %v92 = vld [vmem:[#allocation5 + $0x18] sm:$0xf]
    %v93 = vld [vmem:[#allocation5 + $0x1c] sm:$0xf]
    %v94 = vld [vmem:[#allocation5 + $0x20] sm:$0xf]
    %v95 = vld [vmem:[#allocation5 + $0x24] sm:$0xf]
    %v96 = vld [vmem:[#allocation5 + $0x28] sm:$0xf]
    %v97 = vld [vmem:[#allocation5 + $0x2c] sm:$0xf]
    %v98 = vld [vmem:[#allocation5 + $0x30] sm:$0xf]
    %v99 = vld [vmem:[#allocation5 + $0x34] sm:$0xf]
    %v100 = vld [vmem:[#allocation5 + $0x38] sm:$0xf]
    %v101 = vld [vmem:[#allocation5 + $0x3c] sm:$0xf]
    %v102 = vld [vmem:[%s2] sm:$0x1]
    %v104 = vlaneseq
    %v105 = vshrl.u32 %v104, 7
    %v106 = vsub.s32 0, %v105
    %v107 = vrot.slane %v102, %v106
    %v125 = vunpack.c.l.b16 %v86
    %v126 = vunpack.c.l.b16 %v87
    %v127 = vunpack.c.l.b16 %v88
    %v128 = vunpack.c.l.b16 %v89
    %v129 = vunpack.c.l.b16 %v90
    %v130 = vunpack.c.l.b16 %v91
    %v131 = vunpack.c.l.b16 %v92
    %v132 = vunpack.c.l.b16 %v93
    %v133 = vunpack.c.l.b16 %v94
    %v134 = vunpack.c.l.b16 %v95
    %v135 = vunpack.c.l.b16 %v96
    %v136 = vunpack.c.l.b16 %v97
    %v137 = vunpack.c.l.b16 %v98
    %v138 = vunpack.c.l.b16 %v99
    %v139 = vunpack.c.l.b16 %v100
    %v140 = vunpack.c.l.b16 %v101
    %v141 = vpack.c.b16 %v126, %v125
    %v142 = vpack.c.b16 %v128, %v127
    %v143 = vpack.c.b16 %v130, %v129
    %v144 = vpack.c.b16 %v132, %v131
    %v145 = vpack.c.b16 %v134, %v133
    %v146 = vpack.c.b16 %v136, %v135
    %v147 = vpack.c.b16 %v138, %v137
    %v148 = vpack.c.b16 %v140, %v139
    %157 = vmatprep.subr.bf16.mxu0 0
    %158 = vmatpush1.bf16.msra.mxu0 %v148
    %159 = vmatprep.subr.bf16.mxu0 0
    %160 = vmatpush1.bf16.msra.mxu0 %v147
    %161 = vmatprep.subr.bf16.mxu0 0
    %162 = vmatpush1.bf16.msra.mxu0 %v146
    %163 = vmatprep.subr.bf16.mxu0 0
    %164 = vmatpush1.bf16.msra.mxu0 %v145
    %165 = vmatprep.subr.bf16.mxu0 0
    %166 = vmatpush1.bf16.msra.mxu0 %v144
    %167 = vmatprep.subr.bf16.mxu0 0
    %168 = vmatpush1.bf16.msra.mxu0 %v143
    %169 = vmatprep.subr.bf16.mxu0 0
    %170 = vmatpush1.bf16.msra.mxu0 %v142
    %171 = vmatprep.subr.bf16.mxu0 0
    %172 = vmatpush1.bf16.msra.mxu0 %v141
    %173 = vmatprep.subr.bf16.mxu0 0
    %174 = vmatpush2.bf16.msra.mxu0 0
    %175 = vmatprep.subr.bf16.mxu0 0
    %176 = vmatpush2.bf16.msra.mxu0 0
    %177 = vmatprep.subr.bf16.mxu0 0
    %178 = vmatpush2.bf16.msra.mxu0 0
    %179 = vmatprep.subr.bf16.mxu0 0
    %180 = vmatpush2.bf16.msra.mxu0 0
    %181 = vmatprep.subr.bf16.mxu0 0
    %182 = vmatpush2.bf16.msra.mxu0 0
    %183 = vmatprep.subr.bf16.mxu0 0
    %184 = vmatpush2.bf16.msra.mxu0 0
    %185 = vmatprep.subr.bf16.mxu0 0
    %186 = vmatpush2.bf16.msra.mxu0 0
    %187 = vmatprep.subr.bf16.mxu0 0
    %188 = vmatpush2.bf16.msra.mxu0 0
    %189 = vmatprep.mubr.bf16.mxu0 0
    %190 = vmatmul.mubr.bf16.gmra.mxu0 %v85
    %v191 = vpop.f32.mrf.mxu0
    %v192 = vadd.f32 %v107, %v191
    %v193 = vpop.f32.mrf.mxu0
    %v194 = vpop.f32.mrf.mxu0
    %v195 = vadd.f32 %v107, %v194
    %v196 = vpop.f32.mrf.mxu0
    %197 = vdwg.mxu0
    %v198 = vmax.f32 %v192, 0.0
    %v199 = vmax.f32 %v195, 0.0
    %v200 = vpack.c.bf16 %v199, %v198
    %v201 = vld [vmem:[#allocation7] sm:$0xf]
    %v202 = vld [vmem:[#allocation7 + $0x4] sm:$0xf]
    %v203 = vld [vmem:[#allocation7 + $0x8] sm:$0xf]
    %v204 = vld [vmem:[#allocation7 + $0xc] sm:$0xf]
    %v205 = vld [vmem:[#allocation7 + $0x10] sm:$0xf]
    %v206 = vld [vmem:[#allocation7 + $0x14] sm:$0xf]
    %v207 = vld [vmem:[#allocation7 + $0x18] sm:$0xf]
    %v208 = vld [vmem:[#allocation7 + $0x1c] sm:$0xf]
    %v209 = vld [vmem:[#allocation7 + $0x20] sm:$0xf]
    %v210 = vld [vmem:[#allocation7 + $0x24] sm:$0xf]
    %v211 = vld [vmem:[#allocation7 + $0x28] sm:$0xf]
    %v212 = vld [vmem:[#allocation7 + $0x2c] sm:$0xf]
    %v213 = vld [vmem:[#allocation7 + $0x30] sm:$0xf]
    %v214 = vld [vmem:[#allocation7 + $0x34] sm:$0xf]
    %v215 = vld [vmem:[#allocation7 + $0x38] sm:$0xf]
    %v216 = vld [vmem:[#allocation7 + $0x3c] sm:$0xf]
    %v217 = vld [vmem:[%s4] sm:$0x1]
    %v219 = vlaneseq
    %v220 = vshrl.u32 %v219, 7
    %v221 = vsub.s32 0, %v220
    %v222 = vrot.slane %v217, %v221
    %v240 = vunpack.c.l.b16 %v201
    %v241 = vunpack.c.l.b16 %v202
    %v242 = vunpack.c.l.b16 %v203
    %v243 = vunpack.c.l.b16 %v204
    %v244 = vunpack.c.l.b16 %v205
    %v245 = vunpack.c.l.b16 %v206
    %v246 = vunpack.c.l.b16 %v207
    %v247 = vunpack.c.l.b16 %v208
    %v248 = vunpack.c.l.b16 %v209
    %v249 = vunpack.c.l.b16 %v210
    %v250 = vunpack.c.l.b16 %v211
    %v251 = vunpack.c.l.b16 %v212
    %v252 = vunpack.c.l.b16 %v213
    %v253 = vunpack.c.l.b16 %v214
    %v254 = vunpack.c.l.b16 %v215
    %v255 = vunpack.c.l.b16 %v216
    %v256 = vpack.c.b16 %v241, %v240
    %v257 = vpack.c.b16 %v243, %v242
    %v258 = vpack.c.b16 %v245, %v244
    %v259 = vpack.c.b16 %v247, %v246
    %v260 = vpack.c.b16 %v249, %v248
    %v261 = vpack.c.b16 %v251, %v250
    %v262 = vpack.c.b16 %v253, %v252
    %v263 = vpack.c.b16 %v255, %v254
    %272 = vmatprep.subr.bf16.mxu0 0
    %273 = vmatpush1.bf16.msra.mxu0 %v263
    %274 = vmatprep.subr.bf16.mxu0 0
    %275 = vmatpush1.bf16.msra.mxu0 %v262
    %276 = vmatprep.subr.bf16.mxu0 0
    %277 = vmatpush1.bf16.msra.mxu0 %v261
    %278 = vmatprep.subr.bf16.mxu0 0
    %279 = vmatpush1.bf16.msra.mxu0 %v260
    %280 = vmatprep.subr.bf16.mxu0 0
    %281 = vmatpush1.bf16.msra.mxu0 %v259
    %282 = vmatprep.subr.bf16.mxu0 0
    %283 = vmatpush1.bf16.msra.mxu0 %v258
    %284 = vmatprep.subr.bf16.mxu0 0
    %285 = vmatpush1.bf16.msra.mxu0 %v257
    %286 = vmatprep.subr.bf16.mxu0 0
    %287 = vmatpush1.bf16.msra.mxu0 %v256
    %288 = vmatprep.subr.bf16.mxu0 0
    %289 = vmatpush2.bf16.msra.mxu0 0
    %290 = vmatprep.subr.bf16.mxu0 0
    %291 = vmatpush2.bf16.msra.mxu0 0
    %292 = vmatprep.subr.bf16.mxu0 0
    %293 = vmatpush2.bf16.msra.mxu0 0
    %294 = vmatprep.subr.bf16.mxu0 0
    %295 = vmatpush2.bf16.msra.mxu0 0
    %296 = vmatprep.subr.bf16.mxu0 0
    %297 = vmatpush2.bf16.msra.mxu0 0
    %298 = vmatprep.subr.bf16.mxu0 0
    %299 = vmatpush2.bf16.msra.mxu0 0
    %300 = vmatprep.subr.bf16.mxu0 0
    %301 = vmatpush2.bf16.msra.mxu0 0
    %302 = vmatprep.subr.bf16.mxu0 0
    %303 = vmatpush2.bf16.msra.mxu0 0
    %304 = vmatprep.mubr.bf16.mxu0 0
    %305 = vmatmul.mubr.bf16.gmra.mxu0 %v200
    %v306 = vpop.f32.mrf.mxu0
    %v307 = vadd.f32 %v222, %v306
    %v308 = vpop.f32.mrf.mxu0
    %v309 = vpop.f32.mrf.mxu0
    %v310 = vadd.f32 %v222, %v309
    %v311 = vpop.f32.mrf.mxu0
    %312 = vdwg.mxu0
    %v313 = vmax.f32 %v307, 0.0
    %v314 = vmax.f32 %v310, 0.0
    %v315 = vpack.c.bf16 %v314, %v313
    %v316 = vld [vmem:[#allocation8] sm:$0xf]
    %v317 = vld [vmem:[#allocation8 + $0x4] sm:$0xf]
    %v318 = vld [vmem:[#allocation8 + $0x8] sm:$0xf]
    %v319 = vld [vmem:[#allocation8 + $0xc] sm:$0xf]
    %v320 = vld [vmem:[#allocation8 + $0x10] sm:$0xf]
    %v321 = vld [vmem:[#allocation8 + $0x14] sm:$0xf]
    %v322 = vld [vmem:[#allocation8 + $0x18] sm:$0xf]
    %v323 = vld [vmem:[#allocation8 + $0x1c] sm:$0xf]
    %v324 = vld [vmem:[#allocation8 + $0x20] sm:$0xf]
    %v325 = vld [vmem:[#allocation8 + $0x24] sm:$0xf]
    %v326 = vld [vmem:[#allocation8 + $0x28] sm:$0xf]
    %v327 = vld [vmem:[#allocation8 + $0x2c] sm:$0xf]
    %v328 = vld [vmem:[#allocation8 + $0x30] sm:$0xf]
    %v329 = vld [vmem:[#allocation8 + $0x34] sm:$0xf]
    %v330 = vld [vmem:[#allocation8 + $0x38] sm:$0xf]
    %v331 = vld [vmem:[#allocation8 + $0x3c] sm:$0xf]
    %v332 = vld [vmem:[%s6] sm:$0x1]
    %v334 = vlaneseq
    %v335 = vshrl.u32 %v334, 7
    %v336 = vsub.s32 0, %v335
    %v337 = vrot.slane %v332, %v336
    %v355 = vunpack.c.l.b16 %v316
    %v356 = vunpack.c.l.b16 %v317
    %v357 = vunpack.c.l.b16 %v318
    %v358 = vunpack.c.l.b16 %v319
    %v359 = vunpack.c.l.b16 %v320
    %v360 = vunpack.c.l.b16 %v321
    %v361 = vunpack.c.l.b16 %v322
    %v362 = vunpack.c.l.b16 %v323
    %v363 = vunpack.c.l.b16 %v324
    %v364 = vunpack.c.l.b16 %v325
    %v365 = vunpack.c.l.b16 %v326
    %v366 = vunpack.c.l.b16 %v327
    %v367 = vunpack.c.l.b16 %v328
    %v368 = vunpack.c.l.b16 %v329
    %v369 = vunpack.c.l.b16 %v330
    %v370 = vunpack.c.l.b16 %v331
    %v371 = vpack.c.b16 %v356, %v355
    %v372 = vpack.c.b16 %v358, %v357
    %v373 = vpack.c.b16 %v360, %v359
    %v374 = vpack.c.b16 %v362, %v361
    %v375 = vpack.c.b16 %v364, %v363
    %v376 = vpack.c.b16 %v366, %v365
    %v377 = vpack.c.b16 %v368, %v367
    %v378 = vpack.c.b16 %v370, %v369
    %387 = vmatprep.subr.bf16.mxu0 0
    %388 = vmatpush1.bf16.msra.mxu0 %v378
    %389 = vmatprep.subr.bf16.mxu0 0
    %390 = vmatpush1.bf16.msra.mxu0 %v377
    %391 = vmatprep.subr.bf16.mxu0 0
    %392 = vmatpush1.bf16.msra.mxu0 %v376
    %393 = vmatprep.subr.bf16.mxu0 0
    %394 = vmatpush1.bf16.msra.mxu0 %v375
    %395 = vmatprep.subr.bf16.mxu0 0
    %396 = vmatpush1.bf16.msra.mxu0 %v374
    %397 = vmatprep.subr.bf16.mxu0 0
    %398 = vmatpush1.bf16.msra.mxu0 %v373
    %399 = vmatprep.subr.bf16.mxu0 0
    %400 = vmatpush1.bf16.msra.mxu0 %v372
    %401 = vmatprep.subr.bf16.mxu0 0
    %402 = vmatpush1.bf16.msra.mxu0 %v371
    %403 = vmatprep.subr.bf16.mxu0 0
    %404 = vmatpush2.bf16.msra.mxu0 0
    %405 = vmatprep.subr.bf16.mxu0 0
    %406 = vmatpush2.bf16.msra.mxu0 0
    %407 = vmatprep.subr.bf16.mxu0 0
    %408 = vmatpush2.bf16.msra.mxu0 0
    %409 = vmatprep.subr.bf16.mxu0 0
    %410 = vmatpush2.bf16.msra.mxu0 0
    %411 = vmatprep.subr.bf16.mxu0 0
    %412 = vmatpush2.bf16.msra.mxu0 0
    %413 = vmatprep.subr.bf16.mxu0 0
    %414 = vmatpush2.bf16.msra.mxu0 0
    %415 = vmatprep.subr.bf16.mxu0 0
    %416 = vmatpush2.bf16.msra.mxu0 0
    %417 = vmatprep.subr.bf16.mxu0 0
    %418 = vmatpush2.bf16.msra.mxu0 0
    %419 = vmatprep.mubr.bf16.mxu0 0
    %420 = vmatmul.mubr.bf16.gmra.mxu0 %v315
    %v421 = vpop.f32.mrf.mxu0
    %v422 = vadd.f32 %v337, %v421
    %v423 = vpop.f32.mrf.mxu0
    %v424 = vpop.f32.mrf.mxu0
    %v425 = vadd.f32 %v337, %v424
    %v426 = vpop.f32.mrf.mxu0
    %427 = vdwg.mxu0
    %428 = vst [vmem:[#allocation10] sm:$0xff] %v422
    %429 = vst [vmem:[#allocation10 + $0x8] sm:$0xff] %v425
    // Predicated region
    $region46: #{tpu_custom_call.1} parent=1 // pred_check
      _
    $region47: #{tpu_custom_call.1} parent=1 // pred_check_branch
      %431 = sbr.rel (0) target = $region49
    $region48: #{tpu_custom_call.1} parent=1 // pred_region
      %s433 = ssub.s32 256, 256
      %434 = vsyncadd [#allocation4], %s433
      %s435 = sshll.u32 [#allocation10], 4
      %s436 = int_to_ptr.vmem [resolvable:$true] %s435
      %441 = dma.vmem_to_hbm [thread:$0]  %s436, 256, %s7, [#allocation4], 128, 128, 8
    $region49: #{tpu_custom_call.1} parent=1 // pred_fallthru
      _
    // Predicated region
    $region50: #{tpu_custom_call.1} parent=1 // pred_check
      _
    $region51: #{tpu_custom_call.1} parent=1 // pred_check_branch
      %443 = sbr.rel (0) target = $region53
    $region52: #{tpu_custom_call.1} parent=1 // pred_region
      %444 = dma.done [#allocation4], 256
    $region53: #{tpu_custom_call.1} parent=1 // pred_fallthru
      _
    %445 = vsyncpa [#allocation3], 1
    %446 = vsyncpa [#allocation6], 1
    %447 = vsyncpa [#allocation9], 1
    %448 = vsyncpa [#allocation4], 1

</llo_original>
